<compile_context>
chip_gen: v7x
topology: tpu7x:2x2x1
jax: 0.10.0
libtpu: 0.0.40
codegen_flags: <defaults>
</compile_context>

<pallas_src>
import functools

import jax
import jax.numpy as jnp
import numpy as np
from jax.experimental import pallas as pl
from jax.experimental.pallas import tpu as pltpu

BIG_NEG = -1e9
LANE = 128


def _round_up(a, b):
    return (a + b - 1) // b * b


# ---------------------------------------------------------------------------
# Kernel 1: Search.forward  ==  identity on x  (ctx unused, exactly as in torch)
# Lane-dense copy: flatten -> [rows, 128] so every store is a full vreg vst.
# ---------------------------------------------------------------------------
def _identity_kernel(x_ref, o_ref):
    o_ref[...] = x_ref[...]


def search_forward(x, ctx, *, block_rows=2048):
    """Search.forward((x, ctx)) -> x, routed through a lane-dense Pallas copy."""
    del ctx  # forward() ignores ctx
    shape = x.shape
    T = int(np.prod(shape))

    rows_needed = -(-T // LANE)                         # ceil(T / 128)
    rt = min(block_rows, _round_up(rows_needed, 8))     # rows per tile, mult of 8
    R = _round_up(rows_needed, rt)
    Tp = R * LANE

    flat = x.reshape(-1)
    if Tp != T:
        flat = jnp.pad(flat, (0, Tp - T))
    x2 = flat.reshape(R, LANE)

    y = pl.pallas_call(
        _identity_kernel,
        out_shape=jax.ShapeDtypeStruct((R, LANE), x.dtype),
        grid=(R // rt,),
        in_specs=[pl.BlockSpec((rt, LANE), lambda i: (i, 0))],
        out_specs=pl.BlockSpec((rt, LANE), lambda i: (i, 0)),
        compiler_params=pltpu.CompilerParams(
            dimension_semantics=("parallel",)),
    )(x2)
    return y.reshape(-1)[:T].reshape(shape)


# ---------------------------------------------------------------------------
# Kernel 2: the hot path of Deduce.logits + Search.search
#   y    = (x @ adapt_wT) @ table_wT + table_b        # logits  [M, N]
#   logp = y - logsumexp(y, -1, keepdims=True)
#   prior = one_hot(tgt, N, on=0.0, off=BIG_NEG)
#   logi = where(tgt == UNK, y, prior)
# Weights are pre-transposed in the wrapper: adapt [H, D], table [D, N].
# ---------------------------------------------------------------------------
def _search_kernel(tgt_ref, x_ref, adapt_ref, table_ref, bias_ref,
                   logp_ref, logi_ref, *, unk_id):
    x = x_ref[...]                      # [TM, H] matmul dtype (bf16)
    a = adapt_ref[...]                  # [H, D]  matmul dtype (pre-transposed)
    t = table_ref[...]                  # [D, N]  matmul dtype (pre-transposed)
    b = bias_ref[...]                   # [1, N]  f32

    # einsum('bih,ph->bip') then einsum('bie,ne->bin') + bias, rows flattened;
    # MXU consumes [M,K]x[K,N] directly, f32 accumulation.
    h = jnp.dot(x, a, preferred_element_type=jnp.float32)               # [TM, D]
    y = jnp.dot(h.astype(t.dtype), t,
                preferred_element_type=jnp.float32) + b                 # [TM, N]

    # logsumexp along vocab (f32 on the VPU/EUP, XLU lane reductions)
    m = jnp.max(y, axis=-1, keepdims=True)
    lse = m + jnp.log(jnp.sum(jnp.exp(y - m), axis=-1, keepdims=True))
    logp_ref[...] = y - lse

    tgt = tgt_ref[...]                  # [TM, 1] i32
    col = jax.lax.broadcasted_iota(jnp.int32, y.shape, 1)               # [TM, N]
    prior = jnp.where(col == tgt, jnp.float32(0.0), jnp.float32(BIG_NEG))
    unk = tgt == unk_id                 # [TM, 1] bool, broadcast over N
    logi_ref[...] = jnp.where(unk, y, prior)


def search_logp(tgt, x, adapt_w, table_w, table_b, *, unk_id, tm=128,
                matmul_dtype=jnp.bfloat16):
    """Pallas version of Search.search() hot path on pre-decoded hidden states.

    adapt_w: [D, H], table_w: [N, D], table_b: [N]  (torch layouts); transposed
    here once so the kernel does plain [M,K]x[K,N] matmuls.
    """
    B, S, H = x.shape
    N, D = table_w.shape
    assert N % 128 == 0, "pad vocab to a multiple of 128 (BIG_NEG bias on pads)"
    M = B * S
    tm = min(tm, _round_up(M, 8))       # don't blow tiny batches up to 128 rows
    Mp = _round_up(M, tm)

    x2 = x.reshape(M, H)
    tgt2 = tgt.reshape(M, 1).astype(jnp.int32)
    if Mp != M:
        x2 = jnp.pad(x2, ((0, Mp - M), (0, 0)))
        tgt2 = jnp.pad(tgt2, ((0, Mp - M), (0, 0)))

    x2 = x2.astype(matmul_dtype)
    adapt_t = adapt_w.T.astype(matmul_dtype)        # [H, D]
    table_t = table_w.T.astype(matmul_dtype)        # [D, N]
    bias2 = table_b.reshape(1, N).astype(jnp.float32)

    kernel = functools.partial(_search_kernel, unk_id=unk_id)

    logp, logi = pl.pallas_call(
        kernel,
        out_shape=(
            jax.ShapeDtypeStruct((Mp, N), jnp.float32),
            jax.ShapeDtypeStruct((Mp, N), jnp.float32),
        ),
        grid_spec=pltpu.PrefetchScalarGridSpec(
            num_scalar_prefetch=0,
            grid=(Mp // tm,),
            in_specs=[
                pl.BlockSpec((tm, 1), lambda i: (i, 0)),   # tgt rows
                pl.BlockSpec((tm, H), lambda i: (i, 0)),   # x rows
                pl.BlockSpec((H, D), lambda i: (0, 0)),    # adapt_w^T (resident)
                pl.BlockSpec((D, N), lambda i: (0, 0)),    # table_w^T (resident)
                pl.BlockSpec((1, N), lambda i: (0, 0)),    # table_b  (resident)
            ],
            out_specs=[
                pl.BlockSpec((tm, N), lambda i: (i, 0)),
                pl.BlockSpec((tm, N), lambda i: (i, 0)),
            ],
        ),
        compiler_params=pltpu.CompilerParams(
            dimension_semantics=("parallel",),
            vmem_limit_bytes=64 * 1024 * 1024,
        ),
    )(tgt2, x2, adapt_t, table_t, bias2)

    logp = logp[:M].reshape(B, S, N)
    logi = logi[:M].reshape(B, S, N)
    unk = tgt == unk_id                 # trivial elementwise; stays outside kernel
    return logp, logi, unk


# ---------------------------------------------------------------------------
if __name__ == "__main__":
    # cfg: PAD=0, UNK=1, END=2, num_toks=N, dim_hidden=H, dim_embed=D, no brackets
    B, S, H, D, N = 2, 8, 32, 16, 128
    UNK = 1

    key = jax.random.PRNGKey(0)
    kx, kc, kt, ka, kw, kb = jax.random.split(key, 6)

    x = jax.random.normal(kx, (B, S, H), jnp.float32)
    ctx = jax.random.normal(kc, (B, S, H), jnp.float32)
    tgt = jax.random.randint(kt, (B, S), 0, N, dtype=jnp.int32)
    # sprinkle some UNK tokens deterministically
    tgt = tgt.at[:, ::3].set(UNK)

    # deterministic parameter init (adapt_w: (p, h) with p=D != H; table_w0: (N, D))
    adapt_w = 0.1 * jax.random.normal(ka, (D, H), jnp.float32)
    table_w = 0.1 * jax.random.normal(kw, (N, D), jnp.float32)
    table_b = 0.01 * jax.random.normal(kb, (N,), jnp.float32)

    # --- Search.forward: returns x unchanged ---
    y = search_forward(x, ctx)
    jax.block_until_ready(y)
    np.testing.assert_allclose(np.asarray(y), np.asarray(x), rtol=0, atol=0)

    # --- Search.search hot path (logits + logsumexp + prior/UNK select) ---
    logp, logi, unk = search_logp(tgt, x, adapt_w, table_w, table_b, unk_id=UNK)
    jax.block_until_ready((logp, logi, unk))

    # reference check in plain JAX, matching the kernel's bf16-matmul / f32-acc path
    xb = x.astype(jnp.bfloat16)
    aT = adapt_w.T.astype(jnp.bfloat16)
    tT = table_w.T.astype(jnp.bfloat16)
    h_ref = jnp.einsum('bih,hd->bid', xb, aT, preferred_element_type=jnp.float32)
    y_ref = jnp.einsum('bid,dn->bin', h_ref.astype(jnp.bfloat16), tT,
                       preferred_element_type=jnp.float32) + table_b
    logp_ref = y_ref - jax.scipy.special.logsumexp(y_ref, axis=-1, keepdims=True)
    prior_ref = jnp.where(
        jax.nn.one_hot(tgt, N, dtype=jnp.float32) > 0, 0.0, BIG_NEG)
    unk_ref = tgt == UNK
    logi_ref = jnp.where(unk_ref[..., None], y_ref, prior_ref)

    np.testing.assert_allclose(np.asarray(logp), np.asarray(logp_ref),
                               rtol=5e-3, atol=5e-3)
    np.testing.assert_allclose(np.asarray(logi), np.asarray(logi_ref),
                               rtol=5e-3, atol=5e-3)
    np.testing.assert_array_equal(np.asarray(unk), np.asarray(unk_ref))

    print("KERNEL_OK")
</pallas_src>

<mosaic_0001>
module attributes {stable_mosaic.version = 11 : i64} {
  func.func @_identity_kernel(%arg0: i32, %arg1: memref<8x128xf32, #tpu.memory_space<vmem>>, %arg2: memref<8x128xf32, #tpu.memory_space<vmem>>) attributes {dimension_semantics = [#tpu.dimension_semantics<parallel>], iteration_bounds = array<i64: 1>, scalar_prefetch = 0 : i64, scratch_operands = 0 : i64, tpu.core_type = #tpu.core_type<tc>, window_params = [{transform_indices = @transform_0, window_bounds = array<i64: 8, 128>}, {transform_indices = @transform_1, window_bounds = array<i64: 8, 128>}]} {
    %c0 = arith.constant 0 : index
    %c0_0 = arith.constant 0 : index
    %0 = vector.load %arg1[%c0, %c0_0] : memref<8x128xf32, #tpu.memory_space<vmem>>, vector<8x128xf32>
    %c0_1 = arith.constant 0 : index
    %c0_2 = arith.constant 0 : index
    %1 = vector.load %arg2[%c0_1, %c0_2] : memref<8x128xf32, #tpu.memory_space<vmem>>, vector<8x128xf32>
    tpu.vector_store %arg2[%c0_1, %c0_2], %0 {strides = array<i32>} : memref<8x128xf32, #tpu.memory_space<vmem>>, vector<8x128xf32>,
    return
  }
  func.func @transform_0(%arg0: i32) -> (i32, i32) {
    %c0_i32 = arith.constant 0 : i32
    %c0_i32_0 = arith.constant 0 : i32
    return %arg0, %c0_i32 : i32, i32
  }
  func.func @transform_1(%arg0: i32) -> (i32, i32) {
    %c0_i32 = arith.constant 0 : i32
    %c0_i32_0 = arith.constant 0 : i32
    return %arg0, %c0_i32 : i32, i32
  }
}

</mosaic_0001>

<llo_original>
// kernel: tpu_custom_call.1
$region0: #{tpu_custom_call.1}
  #allocation0 [shape = 'u32[]', space=smem, size = 0x4, offset = 0x4, fixed_abs, tag = 'smem constant byte address 0x4 - core index']
  #allocation1 [shape = 'u32[144,128]{1,0:T(1,128)}', space=vmem, size = 0x12000, scoped, tag = 'internal scratch']
  %s0 = inlined_call_operand.hbm [shape: f32[8,128], index: 0, kind: input, shape index: {}]
  %s1 = inlined_call_operand.hbm [shape: f32[8,128], index: 1, kind: output, shape index: {}]
  %s2 = sld [smem:[#allocation0]]
  $region18: #{tpu_custom_call.1} parent=0
    _
  %s4 = ssub.s32 1, %s2
  %s5 = scalar_select 0, %s4, %s2
  $region1: #{tpu_custom_call.1} parent=0
    #allocation2 [shape = 'u8[4096]{0}', space=vmem, size = 0x1000, scoped, tag = 'input window, operand 0, single buffered']
    #allocation3 [shape = 's32[1]{0}', space=sflag, size = 0x4, scoped, tag = 'scoped memory for tpu_custom_call.1']
    #allocation4 [shape = 's32[1]{0}', space=sflag, size = 0x4, scoped, tag = 'scoped memory for tpu_custom_call.1']
    #allocation5 [shape = 'u8[4096]{0}', space=vmem, size = 0x1000, scoped, tag = 'output window, operand 0, single buffered']
    %6 = vsyncpa [#allocation3], 0
    %7 = vsyncpa [#allocation4], 0
    // Predicated region
    $region2: #{tpu_custom_call.1} parent=1 // pred_check
      _
    $region3: #{tpu_custom_call.1} parent=1 // pred_check_branch
      %9 = sbr.rel (0) target = $region5
    $region4: #{tpu_custom_call.1} parent=1 // pred_region
      %s11 = ssub.s32 128, 128
      %12 = vsyncadd [#allocation3], %s11
      %s14 = sshll.u32 [#allocation2], 4
      %s15 = int_to_ptr.vmem [resolvable:$true] %s14
      %17 = dma.hbm_to_vmem [thread:$0]  %s0, 128, %s15, [#allocation3]
    $region5: #{tpu_custom_call.1} parent=1 // pred_fallthru
      _
    // Predicated region
    $region6: #{tpu_custom_call.1} parent=1 // pred_check
      _
    $region7: #{tpu_custom_call.1} parent=1 // pred_check_branch
      %19 = sbr.rel (0) target = $region9
    $region8: #{tpu_custom_call.1} parent=1 // pred_region
      %20 = dma.done [#allocation3], 128
    $region9: #{tpu_custom_call.1} parent=1 // pred_fallthru
      _
    %v21 = vld [vmem:[#allocation2] sm:$0xff]
    %22 = vst [vmem:[#allocation5] sm:$0xff] %v21
    // Predicated region
    $region10: #{tpu_custom_call.1} parent=1 // pred_check
      _
    $region11: #{tpu_custom_call.1} parent=1 // pred_check_branch
      %24 = sbr.rel (0) target = $region13
    $region12: #{tpu_custom_call.1} parent=1 // pred_region
      %s26 = ssub.s32 128, 128
      %27 = vsyncadd [#allocation4], %s26
      %s29 = sshll.u32 [#allocation5], 4
      %s30 = int_to_ptr.vmem [resolvable:$true] %s29
      %32 = dma.vmem_to_hbm [thread:$0]  %s30, 128, %s1, [#allocation4]
    $region13: #{tpu_custom_call.1} parent=1 // pred_fallthru
      _
    // Predicated region
    $region14: #{tpu_custom_call.1} parent=1 // pred_check
      _
    $region15: #{tpu_custom_call.1} parent=1 // pred_check_branch
      %34 = sbr.rel (0) target = $region17
    $region16: #{tpu_custom_call.1} parent=1 // pred_region
      %35 = dma.done [#allocation4], 128
    $region17: #{tpu_custom_call.1} parent=1 // pred_fallthru
      _
    %36 = vsyncpa [#allocation3], 1
    %37 = vsyncpa [#allocation4], 1

</llo_original>
